<compile_context>
chip_gen: v5e
topology: v5e:2x2
jax: 0.10.0
libtpu: 0.0.40
codegen_flags: <defaults>
</compile_context>

<pallas_src>
import functools

import jax
import jax.numpy as jnp
from jax.experimental import pallas as pl
from jax.experimental.pallas import tpu as pltpu


def _shc_kernel(x_ref, sc_ref, mask_ref,
                w1_ref, b1_ref, w2_ref, b2_ref, w3_ref, b3_ref,
                out_ref, copy_sem, *, width):
    # x_ref : (1, C, HW)     sc_ref: (1, C, HsW)    mask_ref: (9, 1, HW)
    # w1    : (C2, C)        b1: (C2, 1)
    # w2    : (9, C2, C2)    b2: (C2, 1)            (per-tap, BN scale folded)
    # w3    : (C,  C2)       b3: (C, 1)
    # out   : (1, C, HW + HsW)
    HW = x_ref.shape[2]
    HsW = sc_ref.shape[2]

    # Shortcut is a pure passthrough: push it with the DMA engine so the copy
    # overlaps with the conv-branch compute and stays off the vld/vst slots.
    sc_copy = pltpu.make_async_copy(
        sc_ref.at[0], out_ref.at[0, :, pl.ds(HW, HsW)], copy_sem.at[0])
    sc_copy.start()

    x = x_ref[0].astype(jnp.float32)                        # (C, HW)

    # ---- conv1: 1x1, C -> C2 (BN scale folded into w1), bias, ReLU ----
    h1 = jnp.dot(w1_ref[...], x, preferred_element_type=jnp.float32)
    h1 = jnp.maximum(h1 + b1_ref[...], 0.0)                 # (C2, HW)

    # ---- conv2: 3x3, pad=1 (BN folded), ReLU ----
    # Tap (dy, dx): output p reads input p + dy*W + dx  ->  lane roll by
    # -(dy*W + dx) plus a precomputed boundary mask; accumulate 9 matmuls.
    acc = None
    t = 0
    for dy in (-1, 0, 1):
        for dx in (-1, 0, 1):
            if dy == 0 and dx == 0:
                tap = h1                                     # center tap: no shift
            else:
                shift = (-(dy * width + dx)) % HW
                tap = pltpu.roll(h1, shift=shift, axis=1) * mask_ref[t]
            contrib = jnp.dot(w2_ref[t], tap, preferred_element_type=jnp.float32)
            acc = contrib if acc is None else acc + contrib
            t += 1
    h2 = jnp.maximum(acc + b2_ref[...], 0.0)                 # (C2, HW)

    # ---- conv3: 1x1, C2 -> C (BN folded), no activation ----
    h3 = jnp.dot(w3_ref[...], h2, preferred_element_type=jnp.float32)
    h3 = h3 + b3_ref[...]                                    # (C, HW)

    out_ref[0, :, 0:HW] = h3.astype(out_ref.dtype)
    sc_copy.wait()


def _fold_bn(gamma, beta, mean, var, eps=1e-5):
    scale = gamma * jax.lax.rsqrt(var + eps)
    bias = beta - mean * scale
    return scale, bias


def _prepare_params(params):
    """Fold BN into the conv weights and reshape for the lane-dense layout."""
    (w1, bn1), (w2, bn2), (w3, bn3) = params
    a1, c1 = _fold_bn(*bn1)
    a2, c2 = _fold_bn(*bn2)
    a3, c3 = _fold_bn(*bn3)
    c2ch = w1.shape[0]
    # 1x1 convs -> (Cout, Cin) matmul weights with BN scale folded in.
    w1m = w1[:, :, 0, 0] * a1[:, None]                       # (C2, C)
    w3m = w3[:, :, 0, 0] * a3[:, None]                       # (C,  C2)
    # 3x3 conv -> 9 per-tap (Cout, Cin) weights, tap index t = ky*3 + kx.
    w2m = jnp.transpose(w2, (2, 3, 0, 1)).reshape(9, c2ch, c2ch) * a2[None, :, None]
    return w1m, c1[:, None], w2m, c2[:, None], w3m, c3[:, None]


def _tap_masks(H, W):
    """(9, 1, H*W) 0/1 masks marking in-bounds neighbours for each 3x3 tap."""
    y = jnp.arange(H * W, dtype=jnp.int32) // W
    x = jnp.arange(H * W, dtype=jnp.int32) % W
    rows = []
    for dy in (-1, 0, 1):
        for dx in (-1, 0, 1):
            ok = (y + dy >= 0) & (y + dy < H) & (x + dx >= 0) & (x + dx < W)
            rows.append(ok)
    return jnp.stack(rows)[:, None, :].astype(jnp.float32)


@jax.jit
def shc_forward(x, shortcut, params):
    """x: (N, C, H, W) f32, shortcut: (N, C, Hs, W) f32 -> (N, C, H+Hs, W)."""
    N, C, H, W = x.shape
    Hs = shortcut.shape[2]
    C2 = C // 2
    HW, HsW = H * W, Hs * W

    w1m, b1, w2m, b2, w3m, b3 = _prepare_params(params)
    masks = _tap_masks(H, W)

    xf = x.reshape(N, C, HW)                 # free: contiguous dims
    scf = shortcut.reshape(N, C, HsW)

    full = lambda shape: pl.BlockSpec(shape, lambda n: (0,) * len(shape))

    out = pl.pallas_call(
        functools.partial(_shc_kernel, width=W),
        out_shape=jax.ShapeDtypeStruct((N, C, HW + HsW), x.dtype),
        grid_spec=pltpu.PrefetchScalarGridSpec(
            num_scalar_prefetch=0,
            grid=(N,),   # weights/masks keep the same block index -> fetched once
            in_specs=[
                pl.BlockSpec((1, C, HW), lambda n: (n, 0, 0)),
                pl.BlockSpec((1, C, HsW), lambda n: (n, 0, 0)),
                full((9, 1, HW)),
                full((C2, C)), full((C2, 1)),
                full((9, C2, C2)), full((C2, 1)),
                full((C, C2)), full((C, 1)),
            ],
            out_specs=pl.BlockSpec((1, C, HW + HsW), lambda n: (n, 0, 0)),
            scratch_shapes=[pltpu.SemaphoreType.DMA((1,))],
        ),
        compiler_params=pltpu.CompilerParams(
            dimension_semantics=("parallel",)),   # batch shards across v7x TCs
    )(xf, scf, masks, w1m, b1, w2m, b2, w3m, b3)

    return out.reshape(N, C, H + Hs, W)


def make_params(key, channel):
    """PyTorch-style params: conv weights in OIHW + BatchNorm running stats."""
    c2 = channel // 2
    ks = jax.random.split(key, 15)

    def bn(k0, k1, k2, k3, c):
        gamma = jax.random.uniform(k0, (c,), jnp.float32, 0.5, 1.5)
        beta = 0.1 * jax.random.normal(k1, (c,), jnp.float32)
        mean = 0.1 * jax.random.normal(k2, (c,), jnp.float32)
        var = jax.random.uniform(k3, (c,), jnp.float32, 0.5, 1.5)
        return (gamma, beta, mean, var)

    w1 = 0.1 * jax.random.normal(ks[0], (c2, channel, 1, 1), jnp.float32)
    bn1 = bn(ks[1], ks[2], ks[3], ks[4], c2)
    w2 = 0.1 * jax.random.normal(ks[5], (c2, c2, 3, 3), jnp.float32)
    bn2 = bn(ks[6], ks[7], ks[8], ks[9], c2)
    w3 = 0.1 * jax.random.normal(ks[10], (channel, c2, 1, 1), jnp.float32)
    bn3 = bn(ks[11], ks[12], ks[13], ks[14], channel)
    return ((w1, bn1), (w2, bn2), (w3, bn3))


def shc_reference(x, shortcut, params):
    """Plain-JAX NCHW reference (lax conv) for correctness checking."""
    (w1, bn1), (w2, bn2), (w3, bn3) = params
    dn = ("NCHW", "OIHW", "NCHW")

    def conv_bn(h, w, bn, pad, relu):
        a, b = _fold_bn(*bn)
        h = jax.lax.conv_general_dilated(h, w, (1, 1), [(pad, pad), (pad, pad)],
                                         dimension_numbers=dn)
        h = h * a[None, :, None, None] + b[None, :, None, None]
        return jnp.maximum(h, 0.0) if relu else h

    h = conv_bn(x, w1, bn1, 0, True)
    h = conv_bn(h, w2, bn2, 1, True)
    h = conv_bn(h, w3, bn3, 0, False)
    return jnp.concatenate([h, shortcut], axis=2)   # concat on NCHW dim 2 (H)


if __name__ == "__main__":
    key = jax.random.PRNGKey(0)
    k_x, k_s, k_p = jax.random.split(key, 3)

    N, C, H, W = 2, 8, 16, 16       # PyTorch NCHW shapes
    Hs = 16                         # shortcut height (concat along dim 2)

    x = jax.random.normal(k_x, (N, C, H, W), jnp.float32)
    sc = jax.random.normal(k_s, (N, C, Hs, W), jnp.float32)
    params = make_params(k_p, C)

    out = jax.block_until_ready(shc_forward(x, sc, params))
    ref = shc_reference(x, sc, params)

    assert out.shape == (N, C, H + Hs, W)
    assert jnp.allclose(out, ref, atol=1e-4, rtol=1e-4), "mismatch vs reference"

    print("KERNEL_OK")
</pallas_src>

<mosaic_0001>
module attributes {stable_mosaic.version = 11 : i64} {
  func.func @_shc_kernel(%arg0: i32, %arg1: memref<1x8x256xf32, #tpu.memory_space<vmem>>, %arg2: memref<1x8x256xf32, #tpu.memory_space<vmem>>, %arg3: memref<9x1x256xf32, #tpu.memory_space<vmem>>, %arg4: memref<4x8xf32, #tpu.memory_space<vmem>>, %arg5: memref<4x1xf32, #tpu.memory_space<vmem>>, %arg6: memref<9x4x4xf32, #tpu.memory_space<vmem>>, %arg7: memref<4x1xf32, #tpu.memory_space<vmem>>, %arg8: memref<8x4xf32, #tpu.memory_space<vmem>>, %arg9: memref<8x1xf32, #tpu.memory_space<vmem>>, %arg10: memref<1x8x512xf32, #tpu.memory_space<vmem>>, %arg11: memref<1x!tpu.dma_semaphore, #tpu.memory_space<semaphore_mem>>) attributes {dimension_semantics = [#tpu.dimension_semantics<parallel>], iteration_bounds = array<i64: 2>, scalar_prefetch = 0 : i64, scratch_operands = 1 : i64, tpu.core_type = #tpu.core_type<tc>, window_params = [{transform_indices = @transform_0, window_bounds = array<i64: 1, 8, 256>}, {transform_indices = @transform_1, window_bounds = array<i64: 1, 8, 256>}, {pipeline_mode = #tpu.pipeline_mode<synchronous>, transform_indices = @transform_2, window_bounds = array<i64: 9, 1, 256>}, {pipeline_mode = #tpu.pipeline_mode<synchronous>, transform_indices = @transform_3, window_bounds = array<i64: 4, 8>}, {pipeline_mode = #tpu.pipeline_mode<synchronous>, transform_indices = @transform_4, window_bounds = array<i64: 4, 1>}, {pipeline_mode = #tpu.pipeline_mode<synchronous>, transform_indices = @transform_5, window_bounds = array<i64: 9, 4, 4>}, {pipeline_mode = #tpu.pipeline_mode<synchronous>, transform_indices = @transform_6, window_bounds = array<i64: 4, 1>}, {pipeline_mode = #tpu.pipeline_mode<synchronous>, transform_indices = @transform_7, window_bounds = array<i64: 8, 4>}, {pipeline_mode = #tpu.pipeline_mode<synchronous>, transform_indices = @transform_8, window_bounds = array<i64: 8, 1>}, {transform_indices = @transform_9, window_bounds = array<i64: 1, 8, 512>}]} {
    %c0_i32 = arith.constant 0 : i32
    %c0_i32_0 = arith.constant 0 : i32
    %c0_i32_1 = arith.constant 0 : i32
    %c0_i32_2 = arith.constant 0 : i32
    %c0_i32_3 = arith.constant 0 : i32
    %0 = tpu.memref_slice %arg2[%c0_i32, %c0_i32_2, %c0_i32_3] : memref<1x8x256xf32, #tpu.memory_space<vmem>> -> memref<1x8x256xf32, #tpu.memory_space<vmem>>
    %1 = tpu.memref_squeeze %0 : memref<1x8x256xf32, #tpu.memory_space<vmem>> -> memref<8x256xf32, #tpu.memory_space<vmem>>
    %c0_i32_4 = arith.constant 0 : i32
    %c256_i32 = arith.constant 256 : i32
    %2 = tpu.memref_slice %arg10[%c0_i32_0, %c0_i32_4, %c256_i32] : memref<1x8x512xf32, #tpu.memory_space<vmem>> -> memref<1x8x256xf32, #tpu.memory_space<vmem>>
    %3 = tpu.memref_squeeze %2 : memref<1x8x256xf32, #tpu.memory_space<vmem>> -> memref<8x256xf32, #tpu.memory_space<vmem>>
    %4 = tpu.memref_slice %arg11[%c0_i32_1] : memref<1x!tpu.dma_semaphore, #tpu.memory_space<semaphore_mem>> -> memref<1x!tpu.dma_semaphore, #tpu.memory_space<semaphore_mem>>
    %5 = tpu.memref_squeeze %4 : memref<1x!tpu.dma_semaphore, #tpu.memory_space<semaphore_mem>> -> memref<!tpu.dma_semaphore, #tpu.memory_space<semaphore_mem>>
    tpu.enqueue_dma source(%1 : memref<8x256xf32, #tpu.memory_space<vmem>>) target(%3 : memref<8x256xf32, #tpu.memory_space<vmem>>) target_semaphore(%5 : memref<!tpu.dma_semaphore, #tpu.memory_space<semaphore_mem>>)
    %c0 = arith.constant 0 : index
    %c0_5 = arith.constant 0 : index
    %c0_6 = arith.constant 0 : index
    %6 = vector.load %arg1[%c0, %c0_5, %c0_6] : memref<1x8x256xf32, #tpu.memory_space<vmem>>, vector<1x8x256xf32>
    %7 = vector.shape_cast %6 : vector<1x8x256xf32> to vector<8x256xf32>
    %c0_7 = arith.constant 0 : index
    %c0_8 = arith.constant 0 : index
    %8 = vector.load %arg4[%c0_7, %c0_8] : memref<4x8xf32, #tpu.memory_space<vmem>>, vector<4x8xf32>
    %cst = arith.constant dense<0.000000e+00> : vector<4x256xf32>
    %9 = tpu.matmul %8, %7, %cst {dimension_numbers = #tpu.dot_dimension_numbers<[1], [0], [0], [1], [0, 0, 1, 1], [], []>} : vector<4x8xf32>, vector<8x256xf32>, vector<4x256xf32> -> vector<4x256xf32>
    %c0_9 = arith.constant 0 : index
    %c0_10 = arith.constant 0 : index
    %10 = vector.load %arg5[%c0_9, %c0_10] : memref<4x1xf32, #tpu.memory_space<vmem>>, vector<4x1xf32>
    %11 = vector.broadcast %10 : vector<4x1xf32> to vector<4x256xf32>
    %12 = arith.addf %9, %11 : vector<4x256xf32>
    %cst_11 = arith.constant 0.000000e+00 : f32
    %13 = vector.broadcast %cst_11 : f32 to vector<4x256xf32>
    %14 = arith.maximumf %12, %13 : vector<4x256xf32>
    %c17_i32 = arith.constant 17 : i32
    %15 = tpu.dynamic_rotate %14 by %c17_i32 dim 1 : vector<4x256xf32>, i32 -> vector<4x256xf32>
    %c0_12 = arith.constant 0 : index
    %c0_13 = arith.constant 0 : index
    %c0_14 = arith.constant 0 : index
    %16 = vector.load %arg3[%c0_12, %c0_13, %c0_14] : memref<9x1x256xf32, #tpu.memory_space<vmem>>, vector<1x1x256xf32>
    %17 = vector.shape_cast %16 : vector<1x1x256xf32> to vector<1x256xf32>
    %18 = vector.broadcast %17 : vector<1x256xf32> to vector<4x256xf32>
    %19 = arith.mulf %15, %18 : vector<4x256xf32>
    %c0_15 = arith.constant 0 : index
    %c0_16 = arith.constant 0 : index
    %c0_17 = arith.constant 0 : index
    %20 = vector.load %arg6[%c0_15, %c0_16, %c0_17] : memref<9x4x4xf32, #tpu.memory_space<vmem>>, vector<1x4x4xf32>
    %21 = vector.shape_cast %20 : vector<1x4x4xf32> to vector<4x4xf32>
    %cst_18 = arith.constant dense<0.000000e+00> : vector<4x256xf32>
    %22 = tpu.matmul %21, %19, %cst_18 {dimension_numbers = #tpu.dot_dimension_numbers<[1], [0], [0], [1], [0, 0, 1, 1], [], []>} : vector<4x4xf32>, vector<4x256xf32>, vector<4x256xf32> -> vector<4x256xf32>
    %c16_i32 = arith.constant 16 : i32
    %23 = tpu.dynamic_rotate %14 by %c16_i32 dim 1 : vector<4x256xf32>, i32 -> vector<4x256xf32>
    %c1 = arith.constant 1 : index
    %c0_19 = arith.constant 0 : index
    %c0_20 = arith.constant 0 : index
    %24 = vector.load %arg3[%c1, %c0_19, %c0_20] : memref<9x1x256xf32, #tpu.memory_space<vmem>>, vector<1x1x256xf32>
    %25 = vector.shape_cast %24 : vector<1x1x256xf32> to vector<1x256xf32>
    %26 = vector.broadcast %25 : vector<1x256xf32> to vector<4x256xf32>
    %27 = arith.mulf %23, %26 : vector<4x256xf32>
    %c1_21 = arith.constant 1 : index
    %c0_22 = arith.constant 0 : index
    %c0_23 = arith.constant 0 : index
    %28 = vector.load %arg6[%c1_21, %c0_22, %c0_23] : memref<9x4x4xf32, #tpu.memory_space<vmem>>, vector<1x4x4xf32>
    %29 = vector.shape_cast %28 : vector<1x4x4xf32> to vector<4x4xf32>
    %cst_24 = arith.constant dense<0.000000e+00> : vector<4x256xf32>
    %30 = tpu.matmul %29, %27, %cst_24 {dimension_numbers = #tpu.dot_dimension_numbers<[1], [0], [0], [1], [0, 0, 1, 1], [], []>} : vector<4x4xf32>, vector<4x256xf32>, vector<4x256xf32> -> vector<4x256xf32>
    %31 = arith.addf %22, %30 : vector<4x256xf32>
    %c15_i32 = arith.constant 15 : i32
    %32 = tpu.dynamic_rotate %14 by %c15_i32 dim 1 : vector<4x256xf32>, i32 -> vector<4x256xf32>
    %c2 = arith.constant 2 : index
    %c0_25 = arith.constant 0 : index
    %c0_26 = arith.constant 0 : index
    %33 = vector.load %arg3[%c2, %c0_25, %c0_26] : memref<9x1x256xf32, #tpu.memory_space<vmem>>, vector<1x1x256xf32>
    %34 = vector.shape_cast %33 : vector<1x1x256xf32> to vector<1x256xf32>
    %35 = vector.broadcast %34 : vector<1x256xf32> to vector<4x256xf32>
    %36 = arith.mulf %32, %35 : vector<4x256xf32>
    %c2_27 = arith.constant 2 : index
    %c0_28 = arith.constant 0 : index
    %c0_29 = arith.constant 0 : index
    %37 = vector.load %arg6[%c2_27, %c0_28, %c0_29] : memref<9x4x4xf32, #tpu.memory_space<vmem>>, vector<1x4x4xf32>
    %38 = vector.shape_cast %37 : vector<1x4x4xf32> to vector<4x4xf32>
    %cst_30 = arith.constant dense<0.000000e+00> : vector<4x256xf32>
    %39 = tpu.matmul %38, %36, %cst_30 {dimension_numbers = #tpu.dot_dimension_numbers<[1], [0], [0], [1], [0, 0, 1, 1], [], []>} : vector<4x4xf32>, vector<4x256xf32>, vector<4x256xf32> -> vector<4x256xf32>
    %40 = arith.addf %31, %39 : vector<4x256xf32>
    %c1_i32 = arith.constant 1 : i32
    %41 = tpu.dynamic_rotate %14 by %c1_i32 dim 1 : vector<4x256xf32>, i32 -> vector<4x256xf32>
    %c3 = arith.constant 3 : index
    %c0_31 = arith.constant 0 : index
    %c0_32 = arith.constant 0 : index
    %42 = vector.load %arg3[%c3, %c0_31, %c0_32] : memref<9x1x256xf32, #tpu.memory_space<vmem>>, vector<1x1x256xf32>
    %43 = vector.shape_cast %42 : vector<1x1x256xf32> to vector<1x256xf32>
    %44 = vector.broadcast %43 : vector<1x256xf32> to vector<4x256xf32>
    %45 = arith.mulf %41, %44 : vector<4x256xf32>
    %c3_33 = arith.constant 3 : index
    %c0_34 = arith.constant 0 : index
    %c0_35 = arith.constant 0 : index
    %46 = vector.load %arg6[%c3_33, %c0_34, %c0_35] : memref<9x4x4xf32, #tpu.memory_space<vmem>>, vector<1x4x4xf32>
    %47 = vector.shape_cast %46 : vector<1x4x4xf32> to vector<4x4xf32>
    %cst_36 = arith.constant dense<0.000000e+00> : vector<4x256xf32>
    %48 = tpu.matmul %47, %45, %cst_36 {dimension_numbers = #tpu.dot_dimension_numbers<[1], [0], [0], [1], [0, 0, 1, 1], [], []>} : vector<4x4xf32>, vector<4x256xf32>, vector<4x256xf32> -> vector<4x256xf32>
    %49 = arith.addf %40, %48 : vector<4x256xf32>
    %c4 = arith.constant 4 : index
    %c0_37 = arith.constant 0 : index
    %c0_38 = arith.constant 0 : index
    %50 = vector.load %arg6[%c4, %c0_37, %c0_38] : memref<9x4x4xf32, #tpu.memory_space<vmem>>, vector<1x4x4xf32>
    %51 = vector.shape_cast %50 : vector<1x4x4xf32> to vector<4x4xf32>
    %cst_39 = arith.constant dense<0.000000e+00> : vector<4x256xf32>
    %52 = tpu.matmul %51, %14, %cst_39 {dimension_numbers = #tpu.dot_dimension_numbers<[1], [0], [0], [1], [0, 0, 1, 1], [], []>} : vector<4x4xf32>, vector<4x256xf32>, vector<4x256xf32> -> vector<4x256xf32>
    %53 = arith.addf %49, %52 : vector<4x256xf32>
    %c255_i32 = arith.constant 255 : i32
    %54 = tpu.dynamic_rotate %14 by %c255_i32 dim 1 : vector<4x256xf32>, i32 -> vector<4x256xf32>
    %c5 = arith.constant 5 : index
    %c0_40 = arith.constant 0 : index
    %c0_41 = arith.constant 0 : index
    %55 = vector.load %arg3[%c5, %c0_40, %c0_41] : memref<9x1x256xf32, #tpu.memory_space<vmem>>, vector<1x1x256xf32>
    %56 = vector.shape_cast %55 : vector<1x1x256xf32> to vector<1x256xf32>
    %57 = vector.broadcast %56 : vector<1x256xf32> to vector<4x256xf32>
    %58 = arith.mulf %54, %57 : vector<4x256xf32>
    %c5_42 = arith.constant 5 : index
    %c0_43 = arith.constant 0 : index
    %c0_44 = arith.constant 0 : index
    %59 = vector.load %arg6[%c5_42, %c0_43, %c0_44] : memref<9x4x4xf32, #tpu.memory_space<vmem>>, vector<1x4x4xf32>
    %60 = vector.shape_cast %59 : vector<1x4x4xf32> to vector<4x4xf32>
    %cst_45 = arith.constant dense<0.000000e+00> : vector<4x256xf32>
    %61 = tpu.matmul %60, %58, %cst_45 {dimension_numbers = #tpu.dot_dimension_numbers<[1], [0], [0], [1], [0, 0, 1, 1], [], []>} : vector<4x4xf32>, vector<4x256xf32>, vector<4x256xf32> -> vector<4x256xf32>
    %62 = arith.addf %53, %61 : vector<4x256xf32>
    %c241_i32 = arith.constant 241 : i32
    %63 = tpu.dynamic_rotate %14 by %c241_i32 dim 1 : vector<4x256xf32>, i32 -> vector<4x256xf32>
    %c6 = arith.constant 6 : index
    %c0_46 = arith.constant 0 : index
    %c0_47 = arith.constant 0 : index
    %64 = vector.load %arg3[%c6, %c0_46, %c0_47] : memref<9x1x256xf32, #tpu.memory_space<vmem>>, vector<1x1x256xf32>
    %65 = vector.shape_cast %64 : vector<1x1x256xf32> to vector<1x256xf32>
    %66 = vector.broadcast %65 : vector<1x256xf32> to vector<4x256xf32>
    %67 = arith.mulf %63, %66 : vector<4x256xf32>
    %c6_48 = arith.constant 6 : index
    %c0_49 = arith.constant 0 : index
    %c0_50 = arith.constant 0 : index
    %68 = vector.load %arg6[%c6_48, %c0_49, %c0_50] : memref<9x4x4xf32, #tpu.memory_space<vmem>>, vector<1x4x4xf32>
    %69 = vector.shape_cast %68 : vector<1x4x4xf32> to vector<4x4xf32>
    %cst_51 = arith.constant dense<0.000000e+00> : vector<4x256xf32>
    %70 = tpu.matmul %69, %67, %cst_51 {dimension_numbers = #tpu.dot_dimension_numbers<[1], [0], [0], [1], [0, 0, 1, 1], [], []>} : vector<4x4xf32>, vector<4x256xf32>, vector<4x256xf32> -> vector<4x256xf32>
    %71 = arith.addf %62, %70 : vector<4x256xf32>
    %c240_i32 = arith.constant 240 : i32
    %72 = tpu.dynamic_rotate %14 by %c240_i32 dim 1 : vector<4x256xf32>, i32 -> vector<4x256xf32>
    %c7 = arith.constant 7 : index
    %c0_52 = arith.constant 0 : index
    %c0_53 = arith.constant 0 : index
    %73 = vector.load %arg3[%c7, %c0_52, %c0_53] : memref<9x1x256xf32, #tpu.memory_space<vmem>>, vector<1x1x256xf32>
    %74 = vector.shape_cast %73 : vector<1x1x256xf32> to vector<1x256xf32>
    %75 = vector.broadcast %74 : vector<1x256xf32> to vector<4x256xf32>
    %76 = arith.mulf %72, %75 : vector<4x256xf32>
    %c7_54 = arith.constant 7 : index
    %c0_55 = arith.constant 0 : index
    %c0_56 = arith.constant 0 : index
    %77 = vector.load %arg6[%c7_54, %c0_55, %c0_56] : memref<9x4x4xf32, #tpu.memory_space<vmem>>, vector<1x4x4xf32>
    %78 = vector.shape_cast %77 : vector<1x4x4xf32> to vector<4x4xf32>
    %cst_57 = arith.constant dense<0.000000e+00> : vector<4x256xf32>
    %79 = tpu.matmul %78, %76, %cst_57 {dimension_numbers = #tpu.dot_dimension_numbers<[1], [0], [0], [1], [0, 0, 1, 1], [], []>} : vector<4x4xf32>, vector<4x256xf32>, vector<4x256xf32> -> vector<4x256xf32>
    %80 = arith.addf %71, %79 : vector<4x256xf32>
    %c239_i32 = arith.constant 239 : i32
    %81 = tpu.dynamic_rotate %14 by %c239_i32 dim 1 : vector<4x256xf32>, i32 -> vector<4x256xf32>
    %c8 = arith.constant 8 : index
    %c0_58 = arith.constant 0 : index
    %c0_59 = arith.constant 0 : index
    %82 = vector.load %arg3[%c8, %c0_58, %c0_59] : memref<9x1x256xf32, #tpu.memory_space<vmem>>, vector<1x1x256xf32>
    %83 = vector.shape_cast %82 : vector<1x1x256xf32> to vector<1x256xf32>
    %84 = vector.broadcast %83 : vector<1x256xf32> to vector<4x256xf32>
    %85 = arith.mulf %81, %84 : vector<4x256xf32>
    %c8_60 = arith.constant 8 : index
    %c0_61 = arith.constant 0 : index
    %c0_62 = arith.constant 0 : index
    %86 = vector.load %arg6[%c8_60, %c0_61, %c0_62] : memref<9x4x4xf32, #tpu.memory_space<vmem>>, vector<1x4x4xf32>
    %87 = vector.shape_cast %86 : vector<1x4x4xf32> to vector<4x4xf32>
    %cst_63 = arith.constant dense<0.000000e+00> : vector<4x256xf32>
    %88 = tpu.matmul %87, %85, %cst_63 {dimension_numbers = #tpu.dot_dimension_numbers<[1], [0], [0], [1], [0, 0, 1, 1], [], []>} : vector<4x4xf32>, vector<4x256xf32>, vector<4x256xf32> -> vector<4x256xf32>
    %89 = arith.addf %80, %88 : vector<4x256xf32>
    %c0_64 = arith.constant 0 : index
    %c0_65 = arith.constant 0 : index
    %90 = vector.load %arg7[%c0_64, %c0_65] : memref<4x1xf32, #tpu.memory_space<vmem>>, vector<4x1xf32>
    %91 = vector.broadcast %90 : vector<4x1xf32> to vector<4x256xf32>
    %92 = arith.addf %89, %91 : vector<4x256xf32>
    %cst_66 = arith.constant 0.000000e+00 : f32
    %93 = vector.broadcast %cst_66 : f32 to vector<4x256xf32>
    %94 = arith.maximumf %92, %93 : vector<4x256xf32>
    %c0_67 = arith.constant 0 : index
    %c0_68 = arith.constant 0 : index
    %95 = vector.load %arg8[%c0_67, %c0_68] : memref<8x4xf32, #tpu.memory_space<vmem>>, vector<8x4xf32>
    %cst_69 = arith.constant dense<0.000000e+00> : vector<8x256xf32>
    %96 = tpu.matmul %95, %94, %cst_69 {dimension_numbers = #tpu.dot_dimension_numbers<[1], [0], [0], [1], [0, 0, 1, 1], [], []>} : vector<8x4xf32>, vector<4x256xf32>, vector<8x256xf32> -> vector<8x256xf32>
    %c0_70 = arith.constant 0 : index
    %c0_71 = arith.constant 0 : index
    %97 = vector.load %arg9[%c0_70, %c0_71] : memref<8x1xf32, #tpu.memory_space<vmem>>, vector<8x1xf32>
    %98 = vector.broadcast %97 : vector<8x1xf32> to vector<8x256xf32>
    %99 = arith.addf %96, %98 : vector<8x256xf32>
    %c0_72 = arith.constant 0 : index
    %c0_73 = arith.constant 0 : index
    %c0_74 = arith.constant 0 : index
    %100 = vector.load %arg10[%c0_72, %c0_73, %c0_74] : memref<1x8x512xf32, #tpu.memory_space<vmem>>, vector<1x8x256xf32>
    %101 = vector.shape_cast %100 : vector<1x8x256xf32> to vector<8x256xf32>
    %102 = vector.shape_cast %99 : vector<8x256xf32> to vector<1x8x256xf32>
    tpu.vector_store %arg10[%c0_72, %c0_73, %c0_74], %102 {strides = array<i32>} : memref<1x8x512xf32, #tpu.memory_space<vmem>>, vector<1x8x256xf32>,
    %c0_i32_75 = arith.constant 0 : i32
    %c0_i32_76 = arith.constant 0 : i32
    %c0_i32_77 = arith.constant 0 : i32
    %c0_i32_78 = arith.constant 0 : i32
    %c0_i32_79 = arith.constant 0 : i32
    %103 = tpu.memref_slice %arg2[%c0_i32_75, %c0_i32_78, %c0_i32_79] : memref<1x8x256xf32, #tpu.memory_space<vmem>> -> memref<1x8x256xf32, #tpu.memory_space<vmem>>
    %104 = tpu.memref_squeeze %103 : memref<1x8x256xf32, #tpu.memory_space<vmem>> -> memref<8x256xf32, #tpu.memory_space<vmem>>
    %c0_i32_80 = arith.constant 0 : i32
    %c256_i32_81 = arith.constant 256 : i32
    %105 = tpu.memref_slice %arg10[%c0_i32_76, %c0_i32_80, %c256_i32_81] : memref<1x8x512xf32, #tpu.memory_space<vmem>> -> memref<1x8x256xf32, #tpu.memory_space<vmem>>
    %106 = tpu.memref_squeeze %105 : memref<1x8x256xf32, #tpu.memory_space<vmem>> -> memref<8x256xf32, #tpu.memory_space<vmem>>
    %107 = tpu.memref_slice %arg11[%c0_i32_77] : memref<1x!tpu.dma_semaphore, #tpu.memory_space<semaphore_mem>> -> memref<1x!tpu.dma_semaphore, #tpu.memory_space<semaphore_mem>>
    %108 = tpu.memref_squeeze %107 : memref<1x!tpu.dma_semaphore, #tpu.memory_space<semaphore_mem>> -> memref<!tpu.dma_semaphore, #tpu.memory_space<semaphore_mem>>
    tpu.wait_dma2 semaphore(%108 : memref<!tpu.dma_semaphore, #tpu.memory_space<semaphore_mem>>) src(%104 : memref<8x256xf32, #tpu.memory_space<vmem>>) dst(%106 : memref<8x256xf32, #tpu.memory_space<vmem>>)
    return
  }
  func.func @transform_0(%arg0: i32) -> (i32, i32, i32) {
    %c0_i32 = arith.constant 0 : i32
    %c0_i32_0 = arith.constant 0 : i32
    %c0_i32_1 = arith.constant 0 : i32
    return %arg0, %c0_i32, %c0_i32_0 : i32, i32, i32
  }
  func.func @transform_1(%arg0: i32) -> (i32, i32, i32) {
    %c0_i32 = arith.constant 0 : i32
    %c0_i32_0 = arith.constant 0 : i32
    %c0_i32_1 = arith.constant 0 : i32
    return %arg0, %c0_i32, %c0_i32_0 : i32, i32, i32
  }
  func.func @transform_2(%arg0: i32) -> (i32, i32, i32) {
    %c0_i32 = arith.constant 0 : i32
    %c0_i32_0 = arith.constant 0 : i32
    %c0_i32_1 = arith.constant 0 : i32
    %c0_i32_2 = arith.constant 0 : i32
    return %c0_i32, %c0_i32_0, %c0_i32_1 : i32, i32, i32
  }
  func.func @transform_3(%arg0: i32) -> (i32, i32) {
    %c0_i32 = arith.constant 0 : i32
    %c0_i32_0 = arith.constant 0 : i32
    %c0_i32_1 = arith.constant 0 : i32
    return %c0_i32, %c0_i32_0 : i32, i32
  }
  func.func @transform_4(%arg0: i32) -> (i32, i32) {
    %c0_i32 = arith.constant 0 : i32
    %c0_i32_0 = arith.constant 0 : i32
    %c0_i32_1 = arith.constant 0 : i32
    return %c0_i32, %c0_i32_0 : i32, i32
  }
  func.func @transform_5(%arg0: i32) -> (i32, i32, i32) {
    %c0_i32 = arith.constant 0 : i32
    %c0_i32_0 = arith.constant 0 : i32
    %c0_i32_1 = arith.constant 0 : i32
    %c0_i32_2 = arith.constant 0 : i32
    return %c0_i32, %c0_i32_0, %c0_i32_1 : i32, i32, i32
  }
  func.func @transform_6(%arg0: i32) -> (i32, i32) {
    %c0_i32 = arith.constant 0 : i32
    %c0_i32_0 = arith.constant 0 : i32
    %c0_i32_1 = arith.constant 0 : i32
    return %c0_i32, %c0_i32_0 : i32, i32
  }
  func.func @transform_7(%arg0: i32) -> (i32, i32) {
    %c0_i32 = arith.constant 0 : i32
    %c0_i32_0 = arith.constant 0 : i32
    %c0_i32_1 = arith.constant 0 : i32
    return %c0_i32, %c0_i32_0 : i32, i32
  }
  func.func @transform_8(%arg0: i32) -> (i32, i32) {
    %c0_i32 = arith.constant 0 : i32
    %c0_i32_0 = arith.constant 0 : i32
    %c0_i32_1 = arith.constant 0 : i32
    return %c0_i32, %c0_i32_0 : i32, i32
  }
  func.func @transform_9(%arg0: i32) -> (i32, i32, i32) {
    %c0_i32 = arith.constant 0 : i32
    %c0_i32_0 = arith.constant 0 : i32
    %c0_i32_1 = arith.constant 0 : i32
    return %arg0, %c0_i32, %c0_i32_0 : i32, i32, i32
  }
}

</mosaic_0001>

<llo_original>
// kernel: shc_forward.1
$region0: #{shc_forward.1}
  #allocation0 [shape = 'u32[]', space=smem, size = 0x4, offset = 0x4, fixed_abs, tag = 'smem constant byte address 0x4 - core index']
  #allocation1 [shape = 'u32[72,128]{1,0:T(1,128)}', space=vmem, size = 0x9000, scoped, tag = 'internal scratch']
  #allocation2 [shape = 's32[1]{0}', space=sflag, size = 0x4, scoped, tag = 'scratch operand']
  #allocation3 [shape = 's32[]', space=sflag, size = 0x4, offset = 0, fixed_abs, tag = 'sflag constant byte address 0x0 - dummy sync flag']
  %s0 = inlined_call_operand.vmem [shape: f32[2,8,256], index: 0, kind: input, shape index: {}]
  %s1 = inlined_call_operand.vmem [shape: f32[2,8,256], index: 1, kind: input, shape index: {}]
  %s2 = inlined_call_operand.vmem [shape: f32[9,1,256], index: 2, kind: input, shape index: {}]
  %s3 = inlined_call_operand.vmem [shape: f32[4,8], index: 3, kind: input, shape index: {}]
  %s4 = inlined_call_operand.vmem [shape: f32[4,1], index: 4, kind: input, shape index: {}]
  %s5 = inlined_call_operand.vmem [shape: f32[9,4,4], index: 5, kind: input, shape index: {}]
  %s6 = inlined_call_operand.vmem [shape: f32[4,1], index: 6, kind: input, shape index: {}]
  %s7 = inlined_call_operand.vmem [shape: f32[8,4], index: 7, kind: input, shape index: {}]
  %s8 = inlined_call_operand.vmem [shape: f32[8,1], index: 8, kind: input, shape index: {}]
  %s9 = inlined_call_operand.vmem [shape: f32[2,8,512], index: 9, kind: output, shape index: {}]
  %s10 = sld [smem:[#allocation0]]
  $region88: #{shc_forward.1} parent=0
    _
  %s12 = ssub.s32 1, %s10
  %s13 = scalar_select 0, %s12, %s10
  loop: start=0, step=1, limit=4
  $region2: #{shc_forward.1} parent=0 // loop_pre_header
    _
  $region3: #{shc_forward.1} parent=0 // loop_header
    %s15 = sphi 0, %s19
    %p16 = scmp.ge.s32.totalorder %s15, 4
    %s25 = sphi 0, %s27
    %s28 = sphi 0, %s25
    %s29 = sphi 0, %s28
    %s45 = sphi 0, %s29
    %s51 = sphi 0, %s53
    %s54 = sphi 0, %s51
    %s55 = sphi 0, %s54
    %s71 = sphi 0, %s55
    %s75 = sphi 0, %s75
    %s77 = sphi 0, %s75
    %s78 = sphi 0, %s77
    %s92 = sphi 0, %s78
    %s96 = sphi 0, %s96
    %s98 = sphi 0, %s96
    %s99 = sphi 0, %s98
    %s113 = sphi 0, %s99
    %s117 = sphi 0, %s117
    %s119 = sphi 0, %s117
    %s120 = sphi 0, %s119
    %s134 = sphi 0, %s120
    %s138 = sphi 0, %s138
    %s140 = sphi 0, %s138
    %s141 = sphi 0, %s140
    %s155 = sphi 0, %s141
    %s159 = sphi 0, %s159
    %s161 = sphi 0, %s159
    %s162 = sphi 0, %s161
    %s176 = sphi 0, %s162
    %s180 = sphi 0, %s180
    %s182 = sphi 0, %s180
    %s183 = sphi 0, %s182
    %s197 = sphi 0, %s183
    %s201 = sphi 0, %s201
    %s203 = sphi 0, %s201
    %s204 = sphi 0, %s203
    %s218 = sphi 0, %s204
    %s224 = sphi 0, %s226
    %s227 = sphi 0, %s224
    %s228 = sphi 0, %s227
    %s244 = sphi 0, %s228
  $region4: #{shc_forward.1} parent=0 // loop_header_branch
    %18 = sbr.rel (%p16) target = $region8
  $region5: #{shc_forward.1} parent=0 // loop_body
    %s20 = ssub.s32 %s15, 1
    %s21 = ssub.s32 %s15, 2
    %s22 = sadd.s32 %s15, 1
    %s23 = ssub.s32 %s15, %s22
    %p24 = scmp.eq.s32.totalorder %s23, 0
    %s26 = sadd.s32 %s25, 1
    %s27 = scalar_select %p24, %s25, %s26
    %p30 = pneg %p24
    %p31 = scmp.eq.s32.totalorder %s15, 1
    %p32 = por %p30, %p31
    %p33 = scmp.ne.s32.totalorder %s25, %s28
    %p34 = scmp.eq.s32.totalorder %s15, 0
    %p35 = por %p33, %p34
    %p36 = scmp.ne.s32.totalorder %s25, %s28
    %p37 = scmp.eq.s32.totalorder %s20, 1
    %p38 = por %p36, %p37
    %p39 = scmp.ne.s32.totalorder %s28, %s29
    %p40 = scmp.eq.s32.totalorder %s20, 0
    %p41 = por %p39, %p40
    %p42 = scmp.ne.s32.totalorder %s28, %s29
    %p43 = scmp.eq.s32.totalorder %s21, 1
    %p44 = por %p42, %p43
    %p46 = scmp.ne.s32.totalorder %s29, %s45
    %p47 = scmp.eq.s32.totalorder %s21, 0
    %p48 = por %p46, %p47
    %s49 = ssub.s32 %s15, %s22
    %p50 = scmp.eq.s32.totalorder %s49, 0
    %s52 = sadd.s32 %s51, 1
    %s53 = scalar_select %p50, %s51, %s52
    %p56 = pneg %p50
    %p57 = scmp.eq.s32.totalorder %s15, 1
    %p58 = por %p56, %p57
    %p59 = scmp.ne.s32.totalorder %s51, %s54
    %p60 = scmp.eq.s32.totalorder %s15, 0
    %p61 = por %p59, %p60
    %p62 = scmp.ne.s32.totalorder %s51, %s54
    %p63 = scmp.eq.s32.totalorder %s20, 1
    %p64 = por %p62, %p63
    %p65 = scmp.ne.s32.totalorder %s54, %s55
    %p66 = scmp.eq.s32.totalorder %s20, 0
    %p67 = por %p65, %p66
    %p68 = scmp.ne.s32.totalorder %s54, %s55
    %p69 = scmp.eq.s32.totalorder %s21, 1
    %p70 = por %p68, %p69
    %p72 = scmp.ne.s32.totalorder %s55, %s71
    %p73 = scmp.eq.s32.totalorder %s21, 0
    %p74 = por %p72, %p73
    %s76 = sadd.s32 %s75, 1
    %p79 = scmp.eq.s32.totalorder %s15, 1
    %p80 = scmp.ne.s32.totalorder %s75, %s77
    %p81 = scmp.eq.s32.totalorder %s15, 0
    %p82 = por %p80, %p81
    %p83 = scmp.ne.s32.totalorder %s75, %s77
    %p84 = scmp.eq.s32.totalorder %s20, 1
    %p85 = por %p83, %p84
    %p86 = scmp.ne.s32.totalorder %s77, %s78
    %p87 = scmp.eq.s32.totalorder %s20, 0
    %p88 = por %p86, %p87
    %p89 = scmp.ne.s32.totalorder %s77, %s78
    %p90 = scmp.eq.s32.totalorder %s21, 1
    %p91 = por %p89, %p90
    %p93 = scmp.ne.s32.totalorder %s78, %s92
    %p94 = scmp.eq.s32.totalorder %s21, 0
    %p95 = por %p93, %p94
    %s97 = sadd.s32 %s96, 1
    %p100 = scmp.eq.s32.totalorder %s15, 1
    %p101 = scmp.ne.s32.totalorder %s96, %s98
    %p102 = scmp.eq.s32.totalorder %s15, 0
    %p103 = por %p101, %p102
    %p104 = scmp.ne.s32.totalorder %s96, %s98
    %p105 = scmp.eq.s32.totalorder %s20, 1
    %p106 = por %p104, %p105
    %p107 = scmp.ne.s32.totalorder %s98, %s99
    %p108 = scmp.eq.s32.totalorder %s20, 0
    %p109 = por %p107, %p108
    %p110 = scmp.ne.s32.totalorder %s98, %s99
    %p111 = scmp.eq.s32.totalorder %s21, 1
    %p112 = por %p110, %p111
    %p114 = scmp.ne.s32.totalorder %s99, %s113
    %p115 = scmp.eq.s32.totalorder %s21, 0
    %p116 = por %p114, %p115
    %s118 = sadd.s32 %s117, 1
    %p121 = scmp.eq.s32.totalorder %s15, 1
    %p122 = scmp.ne.s32.totalorder %s117, %s119
    %p123 = scmp.eq.s32.totalorder %s15, 0
    %p124 = por %p122, %p123
    %p125 = scmp.ne.s32.totalorder %s117, %s119
    %p126 = scmp.eq.s32.totalorder %s20, 1
    %p127 = por %p125, %p126
    %p128 = scmp.ne.s32.totalorder %s119, %s120
    %p129 = scmp.eq.s32.totalorder %s20, 0
    %p130 = por %p128, %p129
    %p131 = scmp.ne.s32.totalorder %s119, %s120
    %p132 = scmp.eq.s32.totalorder %s21, 1
    %p133 = por %p131, %p132
    %p135 = scmp.ne.s32.totalorder %s120, %s134
    %p136 = scmp.eq.s32.totalorder %s21, 0
    %p137 = por %p135, %p136
    %s139 = sadd.s32 %s138, 1
    %p142 = scmp.eq.s32.totalorder %s15, 1
    %p143 = scmp.ne.s32.totalorder %s138, %s140
    %p144 = scmp.eq.s32.totalorder %s15, 0
    %p145 = por %p143, %p144
    %p146 = scmp.ne.s32.totalorder %s138, %s140
    %p147 = scmp.eq.s32.totalorder %s20, 1
    %p148 = por %p146, %p147
    %p149 = scmp.ne.s32.totalorder %s140, %s141
    %p150 = scmp.eq.s32.totalorder %s20, 0
    %p151 = por %p149, %p150
    %p152 = scmp.ne.s32.totalorder %s140, %s141
    %p153 = scmp.eq.s32.totalorder %s21, 1
    %p154 = por %p152, %p153
    %p156 = scmp.ne.s32.totalorder %s141, %s155
    %p157 = scmp.eq.s32.totalorder %s21, 0
    %p158 = por %p156, %p157
    %s160 = sadd.s32 %s159, 1
    %p163 = scmp.eq.s32.totalorder %s15, 1
    %p164 = scmp.ne.s32.totalorder %s159, %s161
    %p165 = scmp.eq.s32.totalorder %s15, 0
    %p166 = por %p164, %p165
    %p167 = scmp.ne.s32.totalorder %s159, %s161
    %p168 = scmp.eq.s32.totalorder %s20, 1
    %p169 = por %p167, %p168
    %p170 = scmp.ne.s32.totalorder %s161, %s162
    %p171 = scmp.eq.s32.totalorder %s20, 0
    %p172 = por %p170, %p171
    %p173 = scmp.ne.s32.totalorder %s161, %s162
    %p174 = scmp.eq.s32.totalorder %s21, 1
    %p175 = por %p173, %p174
    %p177 = scmp.ne.s32.totalorder %s162, %s176
    %p178 = scmp.eq.s32.totalorder %s21, 0
    %p179 = por %p177, %p178
    %s181 = sadd.s32 %s180, 1
    %p184 = scmp.eq.s32.totalorder %s15, 1
    %p185 = scmp.ne.s32.totalorder %s180, %s182
    %p186 = scmp.eq.s32.totalorder %s15, 0
    %p187 = por %p185, %p186
    %p188 = scmp.ne.s32.totalorder %s180, %s182
    %p189 = scmp.eq.s32.totalorder %s20, 1
    %p190 = por %p188, %p189
    %p191 = scmp.ne.s32.totalorder %s182, %s183
    %p192 = scmp.eq.s32.totalorder %s20, 0
    %p193 = por %p191, %p192
    %p194 = scmp.ne.s32.totalorder %s182, %s183
    %p195 = scmp.eq.s32.totalorder %s21, 1
    %p196 = por %p194, %p195
    %p198 = scmp.ne.s32.totalorder %s183, %s197
    %p199 = scmp.eq.s32.totalorder %s21, 0
    %p200 = por %p198, %p199
    %s202 = sadd.s32 %s201, 1
    %p205 = scmp.eq.s32.totalorder %s15, 1
    %p206 = scmp.ne.s32.totalorder %s201, %s203
    %p207 = scmp.eq.s32.totalorder %s15, 0
    %p208 = por %p206, %p207
    %p209 = scmp.ne.s32.totalorder %s201, %s203
    %p210 = scmp.eq.s32.totalorder %s20, 1
    %p211 = por %p209, %p210
    %p212 = scmp.ne.s32.totalorder %s203, %s204
    %p213 = scmp.eq.s32.totalorder %s20, 0
    %p214 = por %p212, %p213
    %p215 = scmp.ne.s32.totalorder %s203, %s204
    %p216 = scmp.eq.s32.totalorder %s21, 1
    %p217 = por %p215, %p216
    %p219 = scmp.ne.s32.totalorder %s204, %s218
    %p220 = scmp.eq.s32.totalorder %s21, 0
    %p221 = por %p219, %p220
    %s222 = ssub.s32 %s15, %s22
    %p223 = scmp.eq.s32.totalorder %s222, 0
    %s225 = sadd.s32 %s224, 1
    %s226 = scalar_select %p223, %s224, %s225
    %p229 = pneg %p223
    %p230 = scmp.eq.s32.totalorder %s15, 1
    %p231 = por %p229, %p230
    %p232 = scmp.ne.s32.totalorder %s224, %s227
    %p233 = scmp.eq.s32.totalorder %s15, 0
    %p234 = por %p232, %p233
    %p235 = scmp.ne.s32.totalorder %s224, %s227
    %p236 = scmp.eq.s32.totalorder %s20, 1
    %p237 = por %p235, %p236
    %p238 = scmp.ne.s32.totalorder %s227, %s228
    %p239 = scmp.eq.s32.totalorder %s20, 0
    %p240 = por %p238, %p239
    %p241 = scmp.ne.s32.totalorder %s227, %s228
    %p242 = scmp.eq.s32.totalorder %s21, 1
    %p243 = por %p241, %p242
    %p245 = scmp.ne.s32.totalorder %s228, %s244
    %p246 = scmp.eq.s32.totalorder %s21, 0
    %p247 = por %p245, %p246
    %p248 = scmp.le.s32.totalorder 1, %s15
    %p249 = scmp.lt.s32.totalorder %s15, 3
    %p250 = pnand %p248, %p249
    %p251 = pneg %p250
    // Predicated region
    $region9: #{shc_forward.1} parent=5 // pred_check
      _
    $region10: #{shc_forward.1} parent=5 // pred_check_branch
      %253 = sbr.rel (%p250) target = $region12
    $region11: #{shc_forward.1} parent=5 // pred_region
      %s254 = ssub.s32 %s15, 1
      // Predicated region
      $region13: #{shc_forward.1} parent=11 // pred_check
        %p255 = pneg %p88
      $region14: #{shc_forward.1} parent=11 // pred_check_branch
        %257 = sbr.rel (%p255) target = $region16
      $region15: #{shc_forward.1} parent=11 // pred_region
        _
      $region16: #{shc_forward.1} parent=11 // pred_fallthru
        _
      // Predicated region
      $region17: #{shc_forward.1} parent=11 // pred_check
        %p258 = pneg %p109
      $region18: #{shc_forward.1} parent=11 // pred_check_branch
        %260 = sbr.rel (%p258) target = $region20
      $region19: #{shc_forward.1} parent=11 // pred_region
        _
      $region20: #{shc_forward.1} parent=11 // pred_fallthru
        _
      // Predicated region
      $region21: #{shc_forward.1} parent=11 // pred_check
        %p261 = pneg %p130
      $region22: #{shc_forward.1} parent=11 // pred_check_branch
        %263 = sbr.rel (%p261) target = $region24
      $region23: #{shc_forward.1} parent=11 // pred_region
        _
      $region24: #{shc_forward.1} parent=11 // pred_fallthru
        _
      // Predicated region
      $region25: #{shc_forward.1} parent=11 // pred_check
        %p264 = pneg %p151
      $region26: #{shc_forward.1} parent=11 // pred_check_branch
        %266 = sbr.rel (%p264) target = $region28
      $region27: #{shc_forward.1} parent=11 // pred_region
        _
      $region28: #{shc_forward.1} parent=11 // pred_fallthru
        _
      // Predicated region
      $region29: #{shc_forward.1} parent=11 // pred_check
        %p267 = pneg %p172
      $region30: #{shc_forward.1} parent=11 // pred_check_branch
        %269 = sbr.rel (%p267) target = $region32
      $region31: #{shc_forward.1} parent=11 // pred_region
        _
      $region32: #{shc_forward.1} parent=11 // pred_fallthru
        _
      // Predicated region
      $region33: #{shc_forward.1} parent=11 // pred_check
        %p270 = pneg %p193
      $region34: #{shc_forward.1} parent=11 // pred_check_branch
        %272 = sbr.rel (%p270) target = $region36
      $region35: #{shc_forward.1} parent=11 // pred_region
        _
      $region36: #{shc_forward.1} parent=11 // pred_fallthru
        _
      // Predicated region
      $region37: #{shc_forward.1} parent=11 // pred_check
        %p273 = pneg %p214
      $region38: #{shc_forward.1} parent=11 // pred_check_branch
        %275 = sbr.rel (%p273) target = $region40
      $region39: #{shc_forward.1} parent=11 // pred_region
        _
      $region40: #{shc_forward.1} parent=11 // pred_fallthru
        _
    $region12: #{shc_forward.1} parent=5 // pred_fallthru
      _
    %p276 = scmp.lt.s32.totalorder %s15, 2
    // Predicated region
    $region41: #{shc_forward.1} parent=5 // pred_check
      %p277 = pneg %p276
    $region42: #{shc_forward.1} parent=5 // pred_check_branch
      %279 = sbr.rel (%p277) target = $region44
    $region43: #{shc_forward.1} parent=5 // pred_region
      // Predicated region
      $region45: #{shc_forward.1} parent=43 // pred_check
        %p280 = pneg %p35
      $region46: #{shc_forward.1} parent=43 // pred_check_branch
        %282 = sbr.rel (%p280) target = $region48
      $region47: #{shc_forward.1} parent=43 // pred_region
        %p283 = scmp.lt.s32.totalorder %s15, 1
        %s284 = scalar_select %p283, %s15, 1
        %s285 = smul.addr %s284, 2
        %s286 = smul.addr %s285, 8
        %s287 = scalar_lea.vmem %s0, %s286
      $region48: #{shc_forward.1} parent=43 // pred_fallthru
        _
      // Predicated region
      $region49: #{shc_forward.1} parent=43 // pred_check
        %p288 = pneg %p61
      $region50: #{shc_forward.1} parent=43 // pred_check_branch
        %290 = sbr.rel (%p288) target = $region52
      $region51: #{shc_forward.1} parent=43 // pred_region
        %p291 = scmp.lt.s32.totalorder %s15, 1
        %s292 = scalar_select %p291, %s15, 1
        %s293 = smul.addr %s292, 2
        %s294 = smul.addr %s293, 8
        %s295 = scalar_lea.vmem %s1, %s294
      $region52: #{shc_forward.1} parent=43 // pred_fallthru
        _
    $region44: #{shc_forward.1} parent=5 // pred_fallthru
      _
    %p296 = scmp.le.s32.totalorder 1, %s15
    %p297 = scmp.lt.s32.totalorder %s15, 3
    %p298 = pnand %p296, %p297
    %p299 = pneg %p298
    // Predicated region
    $region53: #{shc_forward.1} parent=5 // pred_check
      _
    $region54: #{shc_forward.1} parent=5 // pred_check_branch
      %301 = sbr.rel (%p298) target = $region56
    $region55: #{shc_forward.1} parent=5 // pred_region
      %s302 = ssub.s32 %s15, 1
      %p303 = scmp.lt.s32.totalorder %s20, 1
      %s304 = scalar_select %p303, %s20, 1
      %s305 = smul.addr %s304, 2
      %s306 = smul.addr %s305, 8
      %s307 = scalar_lea.vmem %s0, %s306
      %p308 = pneg %p41
      %p309 = pneg %p38
      %p310 = scmp.lt.s32.totalorder %s20, 1
      %s311 = scalar_select %p310, %s20, 1
      %s312 = smul.addr %s311, 2
      %s313 = smul.addr %s312, 8
      %s314 = scalar_lea.vmem %s1, %s313
      %p315 = pneg %p67
      %p316 = pneg %p64
      %p317 = pneg %p88
      %p318 = pneg %p85
      %p319 = pneg %p109
      %p320 = pneg %p106
      %p321 = pneg %p130
      %p322 = pneg %p127
      %p323 = pneg %p151
      %p324 = pneg %p148
      %p325 = pneg %p172
      %p326 = pneg %p169
      %p327 = pneg %p193
      %p328 = pneg %p190
      %p329 = pneg %p214
      %p330 = pneg %p211
      %p331 = pneg %p240
      %p332 = pneg %p237
      %p333 = scmp.lt.s32.totalorder %s20, 1
      %s334 = scalar_select %p333, %s20, 1
      %s335 = smul.addr %s334, 4
      %s336 = smul.addr %s335, 8
      %s337 = scalar_lea.vmem %s9, %s336
      %p338 = scmp.lt.s32.totalorder %s20, 1
      %s339 = scalar_select %p338, %s20, 1
      %s340 = smul.addr %s339, 2
      %s341 = smul.addr %s340, 8
      %s342 = scalar_lea.vmem %s0, %s341
      %p343 = scmp.lt.s32.totalorder %s20, 1
      %s344 = scalar_select %p343, %s20, 1
      %s345 = smul.addr %s344, 2
      %s346 = smul.addr %s345, 8
      %s347 = scalar_lea.vmem %s1, %s346
      %p348 = scmp.lt.s32.totalorder %s20, 1
      %s349 = scalar_select %p348, %s20, 1
      %s350 = smul.addr %s349, 4
      %s351 = smul.addr %s350, 8
      %s352 = scalar_lea.vmem %s9, %s351
      %s353 = scalar_lea.vmem %s352, 16
      // Predicated region
      $region57: #{shc_forward.1} parent=55 // pred_check
        _
      $region58: #{shc_forward.1} parent=55 // pred_check_branch
        %355 = sbr.rel (0) target = $region60
      $region59: #{shc_forward.1} parent=55 // pred_region
        loop: start=0, step=1, limit=1
        $region61: #{shc_forward.1} parent=59 // loop_pre_header
          _
        $region62: #{shc_forward.1} parent=59 // loop_header
          %s357 = sphi 0, %s361
          %p358 = scmp.ge.s32.totalorder %s357, 1
          %s362 = sphi %s347, %s347
          %s363 = sphi %s353, %s353
        $region63: #{shc_forward.1} parent=59 // loop_header_branch
          %360 = sbr.rel (%p358) target = $region67
        $region64: #{shc_forward.1} parent=59 // loop_body
          %v364 = vld [vmem:[%s362] sm:$0xff]
          %365 = vst [vmem:[%s363] sm:$0xff] %v364
          %v366 = vld [vmem:[%s362 + $0x8] sm:$0xff]
          %367 = vst [vmem:[%s363 + $0x8] sm:$0xff] %v366
        $region65: #{shc_forward.1} parent=59 // loop_footer
          %s361 = sadd.s32 1, %s357
        $region66: #{shc_forward.1} parent=59 // loop_footer_branch
          %356 = sbr.rel target = $region62
        $region67: #{shc_forward.1} parent=59 // loop_exit
          _
      $region60: #{shc_forward.1} parent=55 // pred_fallthru
        _
      // Predicated region
      $region68: #{shc_forward.1} parent=55 // pred_check
        _
      $region69: #{shc_forward.1} parent=55 // pred_check_branch
        %369 = sbr.rel target = $region71
      $region70: #{shc_forward.1} parent=55 // pred_region
        _
      $region71: #{shc_forward.1} parent=55 // pred_fallthru
        _
      // Predicated region
      $region72: #{shc_forward.1} parent=55 // pred_check
        _
      $region73: #{shc_forward.1} parent=55 // pred_check_branch
        %372 = sbr.rel (0) target = $region75
      $region74: #{shc_forward.1} parent=55 // pred_region
        %373 = vsyncadd [#allocation2], 256
      $region75: #{shc_forward.1} parent=55 // pred_fallthru
        _
      %v374 = vld [vmem:[%s342] sm:$0xff]
      %v375 = vld [vmem:[%s342 + $0x8] sm:$0xff]
      %v376 = vld [vmem:[%s3] sm:$0xf]
      %v377 = vld [vmem:[%s4] sm:$0xf]
      %379 = vset.pattern.permute.xlu0 0
      %380 = vperm.xlu0 %379, %v377
      %v381 = vpop.permute.xlu0 %380
      %vm383 = vcmask 64512
      %v385 = vsel %vm383, %v376, 0
      %387 = vmatpush.msra.mxu0 0.0
      %388 = vmatpush.msra.mxu0 0.0
      %389 = vmatpush.msra.mxu0 0.0
      %390 = vmatpush.msra.mxu0 0.0
      %391 = vmatpush.msra.mxu0 0.0
      %392 = vmatpush.msra.mxu0 0.0
      %393 = vmatpush.msra.mxu0 0.0
      %394 = vmatpush.msra.mxu0 0.0
      %395 = vmatpush.msra.mxu0 0.0
      %396 = vmatpush.msra.mxu0 0.0
      %397 = vmatpush.msra.mxu0 0.0
      %398 = vmatpush.msra.mxu0 0.0
      %399 = vmatpush.msra.mxu0 0.0
      %400 = vmatpush.msra.mxu0 0.0
      %401 = vmatpush.msra.mxu0 0.0
      %402 = vmatpush.msra.mxu0 %v374
      %403 = vmatmul.f32.gmra.mxu0 %v385
      %v404 = vpop.f32.mrf.mxu0
      %v405 = vadd.f32 %v381, %v404
      %406 = vdwg.mxu0
      %407 = vmatpush.msra.mxu0 0.0
      %408 = vmatpush.msra.mxu0 0.0
      %409 = vmatpush.msra.mxu0 0.0
      %410 = vmatpush.msra.mxu0 0.0
      %411 = vmatpush.msra.mxu0 0.0
      %412 = vmatpush.msra.mxu0 0.0
      %413 = vmatpush.msra.mxu0 0.0
      %414 = vmatpush.msra.mxu0 0.0
      %415 = vmatpush.msra.mxu0 0.0
      %416 = vmatpush.msra.mxu0 0.0
      %417 = vmatpush.msra.mxu0 0.0
      %418 = vmatpush.msra.mxu0 0.0
      %419 = vmatpush.msra.mxu0 0.0
      %420 = vmatpush.msra.mxu0 0.0
      %421 = vmatpush.msra.mxu0 0.0
      %422 = vmatpush.msra.mxu0 %v375
      %423 = vmatmul.f32.gmra.mxu0 %v385
      %v424 = vpop.f32.mrf.mxu0
      %v425 = vadd.f32 %v381, %v424
      %426 = vdwg.mxu0
      %v427 = vmax.f32 %v405, 0.0
      %v428 = vmax.f32 %v425, 0.0
      %429 = vrot.lane.b32.xlu0 %v427, 17
      %v430 = vpop.permute.xlu0 %429
      %431 = vrot.lane.b32.xlu0 %v428, 17
      %v432 = vpop.permute.xlu0 %431
      %v433 = vlaneseq
      %v434 = vand.u32 %v433, 127
      %vm435 = vcmp.lt.s32.totalorder %v434, 17
      %v436 = vsel %vm435, %v430, %v432
      %v437 = vsel %vm435, %v432, %v430
      %v438 = vld [vmem:[%s2] sm:$0x3]
      %v440 = vperm.slane %v438, 0
      %v441 = vperm.slane %v438, 1
      %v444 = vmul.f32 %v437, %v440
      %v445 = vmul.f32 %v436, %v441
      %v446 = vld [vmem:[%s5] sm:$0xf]
      %447 = vrot.lane.b32.xlu0 %v427, 16
      %v448 = vpop.permute.xlu0 %447
      %449 = vrot.lane.b32.xlu0 %v428, 16
      %v450 = vpop.permute.xlu0 %449
      %vm451 = vcmp.lt.s32.totalorder %v434, 16
      %v452 = vsel %vm451, %v448, %v450
      %v453 = vsel %vm451, %v450, %v448
      %s454 = scalar_lea.vmem %s2, 2
      %v455 = vld [vmem:[%s454] sm:$0x3]
      %v457 = vperm.slane %v455, 0
      %v458 = vperm.slane %v455, 1
      %v461 = vmul.f32 %v453, %v457
      %v462 = vmul.f32 %v452, %v458
      %s463 = scalar_lea.vmem %s5, 4
      %v464 = vld [vmem:[%s463] sm:$0xf]
      %vm465 = vcmask 31744
      %v467 = vsel %vm465, %v464, 0
      %vm469 = vcmask 1043456
      %v471 = vsel %vm469, %v461, 0
      %v474 = vsel %vm469, %v462, 0
      %476 = vmatpush.msra.mxu0 0.0
      %477 = vmatpush.msra.mxu0 0.0
      %478 = vmatpush.msra.mxu0 0.0
      %479 = vmatpush.msra.mxu0 0.0
      %480 = vmatpush.msra.mxu0 0.0
      %481 = vmatpush.msra.mxu0 0.0
      %482 = vmatpush.msra.mxu0 0.0
      %483 = vmatpush.msra.mxu0 0.0
      %484 = vmatpush.msra.mxu0 0.0
      %485 = vmatpush.msra.mxu0 0.0
      %486 = vmatpush.msra.mxu0 0.0
      %487 = vmatpush.msra.mxu0 0.0
      %488 = vmatpush.msra.mxu0 0.0
      %489 = vmatpush.msra.mxu0 0.0
      %490 = vmatpush.msra.mxu0 0.0
      %491 = vmatpush.msra.mxu0 %v471
      %492 = vmatmul.f32.gmra.mxu0 %v467
      %v493 = vpop.f32.mrf.mxu0
      %v494 = vadd.f32 0.0, %v493
      %495 = vdwg.mxu0
      %496 = vmatpush.msra.mxu0 0.0
      %497 = vmatpush.msra.mxu0 0.0
      %498 = vmatpush.msra.mxu0 0.0
      %499 = vmatpush.msra.mxu0 0.0
      %500 = vmatpush.msra.mxu0 0.0
      %501 = vmatpush.msra.mxu0 0.0
      %502 = vmatpush.msra.mxu0 0.0
      %503 = vmatpush.msra.mxu0 0.0
      %504 = vmatpush.msra.mxu0 0.0
      %505 = vmatpush.msra.mxu0 0.0
      %506 = vmatpush.msra.mxu0 0.0
      %507 = vmatpush.msra.mxu0 0.0
      %508 = vmatpush.msra.mxu0 0.0
      %509 = vmatpush.msra.mxu0 0.0
      %510 = vmatpush.msra.mxu0 0.0
      %511 = vmatpush.msra.mxu0 %v474
      %512 = vmatmul.f32.gmra.mxu0 %v467
      %v513 = vpop.f32.mrf.mxu0
      %v514 = vadd.f32 0.0, %v513
      %515 = vdwg.mxu0
      %v517 = vsel %vm465, %v446, 0
      %v520 = vsel %vm469, %v444, 0
      %v523 = vsel %vm469, %v445, 0
      %525 = vmatpush.msra.mxu0 0.0
      %526 = vmatpush.msra.mxu0 0.0
      %527 = vmatpush.msra.mxu0 0.0
      %528 = vmatpush.msra.mxu0 0.0
      %529 = vmatpush.msra.mxu0 0.0
      %530 = vmatpush.msra.mxu0 0.0
      %531 = vmatpush.msra.mxu0 0.0
      %532 = vmatpush.msra.mxu0 0.0
      %533 = vmatpush.msra.mxu0 0.0
      %534 = vmatpush.msra.mxu0 0.0
      %535 = vmatpush.msra.mxu0 0.0
      %536 = vmatpush.msra.mxu0 0.0
      %537 = vmatpush.msra.mxu0 0.0
      %538 = vmatpush.msra.mxu0 0.0
      %539 = vmatpush.msra.mxu0 0.0
      %540 = vmatpush.msra.mxu0 %v520
      %541 = vmatmul.f32.gmra.mxu0 %v517
      %v542 = vpop.f32.mrf.mxu0
      %v543 = vadd.f32 %v494, %v542
      %544 = vdwg.mxu0
      %545 = vmatpush.msra.mxu0 0.0
      %546 = vmatpush.msra.mxu0 0.0
      %547 = vmatpush.msra.mxu0 0.0
      %548 = vmatpush.msra.mxu0 0.0
      %549 = vmatpush.msra.mxu0 0.0
      %550 = vmatpush.msra.mxu0 0.0
      %551 = vmatpush.msra.mxu0 0.0
      %552 = vmatpush.msra.mxu0 0.0
      %553 = vmatpush.msra.mxu0 0.0
      %554 = vmatpush.msra.mxu0 0.0
      %555 = vmatpush.msra.mxu0 0.0
      %556 = vmatpush.msra.mxu0 0.0
      %557 = vmatpush.msra.mxu0 0.0
      %558 = vmatpush.msra.mxu0 0.0
      %559 = vmatpush.msra.mxu0 0.0
      %560 = vmatpush.msra.mxu0 %v523
      %561 = vmatmul.f32.gmra.mxu0 %v517
      %v562 = vpop.f32.mrf.mxu0
      %v563 = vadd.f32 %v514, %v562
      %564 = vdwg.mxu0
      %565 = vrot.lane.b32.xlu0 %v427, 15
      %v566 = vpop.permute.xlu0 %565
      %567 = vrot.lane.b32.xlu0 %v428, 15
      %v568 = vpop.permute.xlu0 %567
      %vm569 = vcmp.lt.s32.totalorder %v434, 15
      %v570 = vsel %vm569, %v566, %v568
      %v571 = vsel %vm569, %v568, %v566
      %s572 = scalar_lea.vmem %s2, 4
      %v573 = vld [vmem:[%s572] sm:$0x3]
      %v575 = vperm.slane %v573, 0
      %v576 = vperm.slane %v573, 1
      %v579 = vmul.f32 %v571, %v575
      %v580 = vmul.f32 %v570, %v576
      %s581 = scalar_lea.vmem %s5, 8
      %v582 = vld [vmem:[%s581] sm:$0xf]
      %v584 = vsel %vm465, %v582, 0
      %v587 = vsel %vm469, %v579, 0
      %v590 = vsel %vm469, %v580, 0
      %592 = vmatpush.msra.mxu0 0.0
      %593 = vmatpush.msra.mxu0 0.0
      %594 = vmatpush.msra.mxu0 0.0
      %595 = vmatpush.msra.mxu0 0.0
      %596 = vmatpush.msra.mxu0 0.0
      %597 = vmatpush.msra.mxu0 0.0
      %598 = vmatpush.msra.mxu0 0.0
      %599 = vmatpush.msra.mxu0 0.0
      %600 = vmatpush.msra.mxu0 0.0
      %601 = vmatpush.msra.mxu0 0.0
      %602 = vmatpush.msra.mxu0 0.0
      %603 = vmatpush.msra.mxu0 0.0
      %604 = vmatpush.msra.mxu0 0.0
      %605 = vmatpush.msra.mxu0 0.0
      %606 = vmatpush.msra.mxu0 0.0
      %607 = vmatpush.msra.mxu0 %v587
      %608 = vmatmul.f32.gmra.mxu0 %v584
      %v609 = vpop.f32.mrf.mxu0
      %v610 = vadd.f32 0.0, %v609
      %611 = vdwg.mxu0
      %612 = vmatpush.msra.mxu0 0.0
      %613 = vmatpush.msra.mxu0 0.0
      %614 = vmatpush.msra.mxu0 0.0
      %615 = vmatpush.msra.mxu0 0.0
      %616 = vmatpush.msra.mxu0 0.0
      %617 = vmatpush.msra.mxu0 0.0
      %618 = vmatpush.msra.mxu0 0.0
      %619 = vmatpush.msra.mxu0 0.0
      %620 = vmatpush.msra.mxu0 0.0
      %621 = vmatpush.msra.mxu0 0.0
      %622 = vmatpush.msra.mxu0 0.0
      %623 = vmatpush.msra.mxu0 0.0
      %624 = vmatpush.msra.mxu0 0.0
      %625 = vmatpush.msra.mxu0 0.0
      %626 = vmatpush.msra.mxu0 0.0
      %627 = vmatpush.msra.mxu0 %v590
      %628 = vmatmul.f32.gmra.mxu0 %v584
      %v629 = vpop.f32.mrf.mxu0
      %v630 = vadd.f32 0.0, %v629
      %631 = vdwg.mxu0
      %v632 = vadd.f32 %v543, %v610
      %v633 = vadd.f32 %v563, %v630
      %634 = vrot.lane.b32.xlu0 %v427, 1
      %v635 = vpop.permute.xlu0 %634
      %636 = vrot.lane.b32.xlu0 %v428, 1
      %v637 = vpop.permute.xlu0 %636
      %vm638 = vcmp.lt.s32.totalorder %v434, 1
      %v639 = vsel %vm638, %v635, %v637
      %v640 = vsel %vm638, %v637, %v635
      %s641 = scalar_lea.vmem %s2, 6
      %v642 = vld [vmem:[%s641] sm:$0x3]
      %v644 = vperm.slane %v642, 0
      %v645 = vperm.slane %v642, 1
      %v648 = vmul.f32 %v640, %v644
      %v649 = vmul.f32 %v639, %v645
      %s650 = scalar_lea.vmem %s5, 12
      %v651 = vld [vmem:[%s650] sm:$0xf]
      %v653 = vsel %vm465, %v651, 0
      %v656 = vsel %vm469, %v648, 0
      %v659 = vsel %vm469, %v649, 0
      %661 = vmatpush.msra.mxu0 0.0
      %662 = vmatpush.msra.mxu0 0.0
      %663 = vmatpush.msra.mxu0 0.0
      %664 = vmatpush.msra.mxu0 0.0
      %665 = vmatpush.msra.mxu0 0.0
      %666 = vmatpush.msra.mxu0 0.0
      %667 = vmatpush.msra.mxu0 0.0
      %668 = vmatpush.msra.mxu0 0.0
      %669 = vmatpush.msra.mxu0 0.0
      %670 = vmatpush.msra.mxu0 0.0
      %671 = vmatpush.msra.mxu0 0.0
      %672 = vmatpush.msra.mxu0 0.0
      %673 = vmatpush.msra.mxu0 0.0
      %674 = vmatpush.msra.mxu0 0.0
      %675 = vmatpush.msra.mxu0 0.0
      %676 = vmatpush.msra.mxu0 %v656
      %677 = vmatmul.f32.gmra.mxu0 %v653
      %v678 = vpop.f32.mrf.mxu0
      %v679 = vadd.f32 0.0, %v678
      %680 = vdwg.mxu0
      %681 = vmatpush.msra.mxu0 0.0
      %682 = vmatpush.msra.mxu0 0.0
      %683 = vmatpush.msra.mxu0 0.0
      %684 = vmatpush.msra.mxu0 0.0
      %685 = vmatpush.msra.mxu0 0.0
      %686 = vmatpush.msra.mxu0 0.0
      %687 = vmatpush.msra.mxu0 0.0
      %688 = vmatpush.msra.mxu0 0.0
      %689 = vmatpush.msra.mxu0 0.0
      %690 = vmatpush.msra.mxu0 0.0
      %691 = vmatpush.msra.mxu0 0.0
      %692 = vmatpush.msra.mxu0 0.0
      %693 = vmatpush.msra.mxu0 0.0
      %694 = vmatpush.msra.mxu0 0.0
      %695 = vmatpush.msra.mxu0 0.0
      %696 = vmatpush.msra.mxu0 %v659
      %697 = vmatmul.f32.gmra.mxu0 %v653
      %v698 = vpop.f32.mrf.mxu0
      %v699 = vadd.f32 0.0, %v698
      %700 = vdwg.mxu0
      %v701 = vadd.f32 %v632, %v679
      %v702 = vadd.f32 %v633, %v699
      %s703 = scalar_lea.vmem %s5, 16
      %v704 = vld [vmem:[%s703] sm:$0xf]
      %v706 = vsel %vm465, %v704, 0
      %v709 = vsel %vm469, %v427, 0
      %v712 = vsel %vm469, %v428, 0
      %714 = vmatpush.msra.mxu0 0.0
      %715 = vmatpush.msra.mxu0 0.0
      %716 = vmatpush.msra.mxu0 0.0
      %717 = vmatpush.msra.mxu0 0.0
      %718 = vmatpush.msra.mxu0 0.0
      %719 = vmatpush.msra.mxu0 0.0
      %720 = vmatpush.msra.mxu0 0.0
      %721 = vmatpush.msra.mxu0 0.0
      %722 = vmatpush.msra.mxu0 0.0
      %723 = vmatpush.msra.mxu0 0.0
      %724 = vmatpush.msra.mxu0 0.0
      %725 = vmatpush.msra.mxu0 0.0
      %726 = vmatpush.msra.mxu0 0.0
      %727 = vmatpush.msra.mxu0 0.0
      %728 = vmatpush.msra.mxu0 0.0
      %729 = vmatpush.msra.mxu0 %v709
      %730 = vmatmul.f32.gmra.mxu0 %v706
      %v731 = vpop.f32.mrf.mxu0
      %v732 = vadd.f32 0.0, %v731
      %733 = vdwg.mxu0
      %734 = vmatpush.msra.mxu0 0.0
      %735 = vmatpush.msra.mxu0 0.0
      %736 = vmatpush.msra.mxu0 0.0
      %737 = vmatpush.msra.mxu0 0.0
      %738 = vmatpush.msra.mxu0 0.0
      %739 = vmatpush.msra.mxu0 0.0
      %740 = vmatpush.msra.mxu0 0.0
      %741 = vmatpush.msra.mxu0 0.0
      %742 = vmatpush.msra.mxu0 0.0
      %743 = vmatpush.msra.mxu0 0.0
      %744 = vmatpush.msra.mxu0 0.0
      %745 = vmatpush.msra.mxu0 0.0
      %746 = vmatpush.msra.mxu0 0.0
      %747 = vmatpush.msra.mxu0 0.0
      %748 = vmatpush.msra.mxu0 0.0
      %749 = vmatpush.msra.mxu0 %v712
      %750 = vmatmul.f32.gmra.mxu0 %v706
      %v751 = vpop.f32.mrf.mxu0
      %v752 = vadd.f32 0.0, %v751
      %753 = vdwg.mxu0
      %v754 = vadd.f32 %v701, %v732
      %v755 = vadd.f32 %v702, %v752
      %756 = vrot.lane.b32.xlu0 %v427, 127
      %v757 = vpop.permute.xlu0 %756
      %758 = vrot.lane.b32.xlu0 %v428, 127
      %v759 = vpop.permute.xlu0 %758
      %vm760 = vcmp.lt.s32.totalorder %v434, 127
      %v761 = vsel %vm760, %v757, %v759
      %v762 = vsel %vm760, %v759, %v757
      %s763 = scalar_lea.vmem %s2, 10
      %v764 = vld [vmem:[%s763] sm:$0x3]
      %v766 = vperm.slane %v764, 0
      %v767 = vperm.slane %v764, 1
      %v770 = vmul.f32 %v761, %v766
      %v771 = vmul.f32 %v762, %v767
      %s772 = scalar_lea.vmem %s5, 20
      %v773 = vld [vmem:[%s772] sm:$0xf]
      %v775 = vsel %vm465, %v773, 0
      %v778 = vsel %vm469, %v770, 0
      %v781 = vsel %vm469, %v771, 0
      %783 = vmatpush.msra.mxu0 0.0
      %784 = vmatpush.msra.mxu0 0.0
      %785 = vmatpush.msra.mxu0 0.0
      %786 = vmatpush.msra.mxu0 0.0
      %787 = vmatpush.msra.mxu0 0.0
      %788 = vmatpush.msra.mxu0 0.0
      %789 = vmatpush.msra.mxu0 0.0
      %790 = vmatpush.msra.mxu0 0.0
      %791 = vmatpush.msra.mxu0 0.0
      %792 = vmatpush.msra.mxu0 0.0
      %793 = vmatpush.msra.mxu0 0.0
      %794 = vmatpush.msra.mxu0 0.0
      %795 = vmatpush.msra.mxu0 0.0
      %796 = vmatpush.msra.mxu0 0.0
      %797 = vmatpush.msra.mxu0 0.0
      %798 = vmatpush.msra.mxu0 %v778
      %799 = vmatmul.f32.gmra.mxu0 %v775
      %v800 = vpop.f32.mrf.mxu0
      %v801 = vadd.f32 0.0, %v800
      %802 = vdwg.mxu0
      %803 = vmatpush.msra.mxu0 0.0
      %804 = vmatpush.msra.mxu0 0.0
      %805 = vmatpush.msra.mxu0 0.0
      %806 = vmatpush.msra.mxu0 0.0
      %807 = vmatpush.msra.mxu0 0.0
      %808 = vmatpush.msra.mxu0 0.0
      %809 = vmatpush.msra.mxu0 0.0
      %810 = vmatpush.msra.mxu0 0.0
      %811 = vmatpush.msra.mxu0 0.0
      %812 = vmatpush.msra.mxu0 0.0
      %813 = vmatpush.msra.mxu0 0.0
      %814 = vmatpush.msra.mxu0 0.0
      %815 = vmatpush.msra.mxu0 0.0
      %816 = vmatpush.msra.mxu0 0.0
      %817 = vmatpush.msra.mxu0 0.0
      %818 = vmatpush.msra.mxu0 %v781
      %819 = vmatmul.f32.gmra.mxu0 %v775
      %v820 = vpop.f32.mrf.mxu0
      %v821 = vadd.f32 0.0, %v820
      %822 = vdwg.mxu0
      %v823 = vadd.f32 %v754, %v801
      %v824 = vadd.f32 %v755, %v821
      %825 = vrot.lane.b32.xlu0 %v427, 113
      %v826 = vpop.permute.xlu0 %825
      %827 = vrot.lane.b32.xlu0 %v428, 113
      %v828 = vpop.permute.xlu0 %827
      %vm829 = vcmp.lt.s32.totalorder %v434, 113
      %v830 = vsel %vm829, %v826, %v828
      %v831 = vsel %vm829, %v828, %v826
      %s832 = scalar_lea.vmem %s2, 12
      %v833 = vld [vmem:[%s832] sm:$0x3]
      %v835 = vperm.slane %v833, 0
      %v836 = vperm.slane %v833, 1
      %v839 = vmul.f32 %v830, %v835
      %v840 = vmul.f32 %v831, %v836
      %s841 = scalar_lea.vmem %s5, 24
      %v842 = vld [vmem:[%s841] sm:$0xf]
      %v844 = vsel %vm465, %v842, 0
      %v847 = vsel %vm469, %v839, 0
      %v850 = vsel %vm469, %v840, 0
      %852 = vmatpush.msra.mxu0 0.0
      %853 = vmatpush.msra.mxu0 0.0
      %854 = vmatpush.msra.mxu0 0.0
      %855 = vmatpush.msra.mxu0 0.0
      %856 = vmatpush.msra.mxu0 0.0
      %857 = vmatpush.msra.mxu0 0.0
      %858 = vmatpush.msra.mxu0 0.0
      %859 = vmatpush.msra.mxu0 0.0
      %860 = vmatpush.msra.mxu0 0.0
      %861 = vmatpush.msra.mxu0 0.0
      %862 = vmatpush.msra.mxu0 0.0
      %863 = vmatpush.msra.mxu0 0.0
      %864 = vmatpush.msra.mxu0 0.0
      %865 = vmatpush.msra.mxu0 0.0
      %866 = vmatpush.msra.mxu0 0.0
      %867 = vmatpush.msra.mxu0 %v847
      %868 = vmatmul.f32.gmra.mxu0 %v844
      %v869 = vpop.f32.mrf.mxu0
      %v870 = vadd.f32 0.0, %v869
      %871 = vdwg.mxu0
      %872 = vmatpush.msra.mxu0 0.0
      %873 = vmatpush.msra.mxu0 0.0
      %874 = vmatpush.msra.mxu0 0.0
      %875 = vmatpush.msra.mxu0 0.0
      %876 = vmatpush.msra.mxu0 0.0
      %877 = vmatpush.msra.mxu0 0.0
      %878 = vmatpush.msra.mxu0 0.0
      %879 = vmatpush.msra.mxu0 0.0
      %880 = vmatpush.msra.mxu0 0.0
      %881 = vmatpush.msra.mxu0 0.0
      %882 = vmatpush.msra.mxu0 0.0
      %883 = vmatpush.msra.mxu0 0.0
      %884 = vmatpush.msra.mxu0 0.0
      %885 = vmatpush.msra.mxu0 0.0
      %886 = vmatpush.msra.mxu0 0.0
      %887 = vmatpush.msra.mxu0 %v850
      %888 = vmatmul.f32.gmra.mxu0 %v844
      %v889 = vpop.f32.mrf.mxu0
      %v890 = vadd.f32 0.0, %v889
      %891 = vdwg.mxu0
      %v892 = vadd.f32 %v823, %v870
      %v893 = vadd.f32 %v824, %v890
      %894 = vrot.lane.b32.xlu0 %v427, 112
      %v895 = vpop.permute.xlu0 %894
      %896 = vrot.lane.b32.xlu0 %v428, 112
      %v897 = vpop.permute.xlu0 %896
      %vm898 = vcmp.lt.s32.totalorder %v434, 112
      %v899 = vsel %vm898, %v895, %v897
      %v900 = vsel %vm898, %v897, %v895
      %s901 = scalar_lea.vmem %s2, 14
      %v902 = vld [vmem:[%s901] sm:$0x3]
      %v904 = vperm.slane %v902, 0
      %v905 = vperm.slane %v902, 1
      %v908 = vmul.f32 %v899, %v904
      %v909 = vmul.f32 %v900, %v905
      %s910 = scalar_lea.vmem %s5, 28
      %v911 = vld [vmem:[%s910] sm:$0xf]
      %v913 = vsel %vm465, %v911, 0
      %v916 = vsel %vm469, %v908, 0
      %v919 = vsel %vm469, %v909, 0
      %921 = vmatpush.msra.mxu0 0.0
      %922 = vmatpush.msra.mxu0 0.0
      %923 = vmatpush.msra.mxu0 0.0
      %924 = vmatpush.msra.mxu0 0.0
      %925 = vmatpush.msra.mxu0 0.0
      %926 = vmatpush.msra.mxu0 0.0
      %927 = vmatpush.msra.mxu0 0.0
      %928 = vmatpush.msra.mxu0 0.0
      %929 = vmatpush.msra.mxu0 0.0
      %930 = vmatpush.msra.mxu0 0.0
      %931 = vmatpush.msra.mxu0 0.0
      %932 = vmatpush.msra.mxu0 0.0
      %933 = vmatpush.msra.mxu0 0.0
      %934 = vmatpush.msra.mxu0 0.0
      %935 = vmatpush.msra.mxu0 0.0
      %936 = vmatpush.msra.mxu0 %v916
      %937 = vmatmul.f32.gmra.mxu0 %v913
      %v938 = vpop.f32.mrf.mxu0
      %v939 = vadd.f32 0.0, %v938
      %940 = vdwg.mxu0
      %941 = vmatpush.msra.mxu0 0.0
      %942 = vmatpush.msra.mxu0 0.0
      %943 = vmatpush.msra.mxu0 0.0
      %944 = vmatpush.msra.mxu0 0.0
      %945 = vmatpush.msra.mxu0 0.0
      %946 = vmatpush.msra.mxu0 0.0
      %947 = vmatpush.msra.mxu0 0.0
      %948 = vmatpush.msra.mxu0 0.0
      %949 = vmatpush.msra.mxu0 0.0
      %950 = vmatpush.msra.mxu0 0.0
      %951 = vmatpush.msra.mxu0 0.0
      %952 = vmatpush.msra.mxu0 0.0
      %953 = vmatpush.msra.mxu0 0.0
      %954 = vmatpush.msra.mxu0 0.0
      %955 = vmatpush.msra.mxu0 0.0
      %956 = vmatpush.msra.mxu0 %v919
      %957 = vmatmul.f32.gmra.mxu0 %v913
      %v958 = vpop.f32.mrf.mxu0
      %v959 = vadd.f32 0.0, %v958
      %960 = vdwg.mxu0
      %v961 = vadd.f32 %v892, %v939
      %v962 = vadd.f32 %v893, %v959
      %963 = vrot.lane.b32.xlu0 %v427, 111
      %v964 = vpop.permute.xlu0 %963
      %965 = vrot.lane.b32.xlu0 %v428, 111
      %v966 = vpop.permute.xlu0 %965
      %vm967 = vcmp.lt.s32.totalorder %v434, 111
      %v968 = vsel %vm967, %v964, %v966
      %v969 = vsel %vm967, %v966, %v964
      %s970 = scalar_lea.vmem %s2, 16
      %v971 = vld [vmem:[%s970] sm:$0x3]
      %v973 = vperm.slane %v971, 0
      %v974 = vperm.slane %v971, 1
      %v977 = vmul.f32 %v968, %v973
      %v978 = vmul.f32 %v969, %v974
      %s979 = scalar_lea.vmem %s5, 32
      %v980 = vld [vmem:[%s979] sm:$0xf]
      %v982 = vsel %vm465, %v980, 0
      %v985 = vsel %vm469, %v977, 0
      %v988 = vsel %vm469, %v978, 0
      %990 = vmatpush.msra.mxu0 0.0
      %991 = vmatpush.msra.mxu0 0.0
      %992 = vmatpush.msra.mxu0 0.0
      %993 = vmatpush.msra.mxu0 0.0
      %994 = vmatpush.msra.mxu0 0.0
      %995 = vmatpush.msra.mxu0 0.0
      %996 = vmatpush.msra.mxu0 0.0
      %997 = vmatpush.msra.mxu0 0.0
      %998 = vmatpush.msra.mxu0 0.0
      %999 = vmatpush.msra.mxu0 0.0
      %1000 = vmatpush.msra.mxu0 0.0
      %1001 = vmatpush.msra.mxu0 0.0
      %1002 = vmatpush.msra.mxu0 0.0
      %1003 = vmatpush.msra.mxu0 0.0
      %1004 = vmatpush.msra.mxu0 0.0
      %1005 = vmatpush.msra.mxu0 %v985
      %1006 = vmatmul.f32.gmra.mxu0 %v982
      %v1007 = vpop.f32.mrf.mxu0
      %v1008 = vadd.f32 0.0, %v1007
      %1009 = vdwg.mxu0
      %1010 = vmatpush.msra.mxu0 0.0
      %1011 = vmatpush.msra.mxu0 0.0
      %1012 = vmatpush.msra.mxu0 0.0
      %1013 = vmatpush.msra.mxu0 0.0
      %1014 = vmatpush.msra.mxu0 0.0
      %1015 = vmatpush.msra.mxu0 0.0
      %1016 = vmatpush.msra.mxu0 0.0
      %1017 = vmatpush.msra.mxu0 0.0
      %1018 = vmatpush.msra.mxu0 0.0
      %1019 = vmatpush.msra.mxu0 0.0
      %1020 = vmatpush.msra.mxu0 0.0
      %1021 = vmatpush.msra.mxu0 0.0
      %1022 = vmatpush.msra.mxu0 0.0
      %1023 = vmatpush.msra.mxu0 0.0
      %1024 = vmatpush.msra.mxu0 0.0
      %1025 = vmatpush.msra.mxu0 %v988
      %1026 = vmatmul.f32.gmra.mxu0 %v982
      %v1027 = vpop.f32.mrf.mxu0
      %v1028 = vadd.f32 0.0, %v1027
      %1029 = vdwg.mxu0
      %v1030 = vadd.f32 %v961, %v1008
      %v1031 = vadd.f32 %v962, %v1028
      %v1032 = vld [vmem:[%s6] sm:$0xf]
      %1034 = vset.pattern.permute.xlu0 0
      %1035 = vperm.xlu0 %1034, %v1032
      %v1036 = vpop.permute.xlu0 %1035
      %v1038 = vadd.f32 %v1030, %v1036
      %v1039 = vadd.f32 %v1031, %v1036
      %v1040 = vmax.f32 %v1038, 0.0
      %v1041 = vmax.f32 %v1039, 0.0
      %v1042 = vld [vmem:[%s7] sm:$0xff]
      %v1043 = vld [vmem:[%s8] sm:$0xff]
      %1045 = vset.pattern.permute.xlu0 0
      %1046 = vperm.xlu0 %1045, %v1043
      %v1047 = vpop.permute.xlu0 %1046
      %v1050 = vsel %vm465, %v1042, 0
      %v1053 = vsel %vm469, %v1040, 0
      %v1056 = vsel %vm469, %v1041, 0
      %1058 = vmatpush.msra.mxu0 0.0
      %1059 = vmatpush.msra.mxu0 0.0
      %1060 = vmatpush.msra.mxu0 0.0
      %1061 = vmatpush.msra.mxu0 0.0
      %1062 = vmatpush.msra.mxu0 0.0
      %1063 = vmatpush.msra.mxu0 0.0
      %1064 = vmatpush.msra.mxu0 0.0
      %1065 = vmatpush.msra.mxu0 0.0
      %1066 = vmatpush.msra.mxu0 0.0
      %1067 = vmatpush.msra.mxu0 0.0
      %1068 = vmatpush.msra.mxu0 0.0
      %1069 = vmatpush.msra.mxu0 0.0
      %1070 = vmatpush.msra.mxu0 0.0
      %1071 = vmatpush.msra.mxu0 0.0
      %1072 = vmatpush.msra.mxu0 0.0
      %1073 = vmatpush.msra.mxu0 %v1053
      %1074 = vmatmul.f32.gmra.mxu0 %v1050
      %v1075 = vpop.f32.mrf.mxu0
      %v1076 = vadd.f32 %v1047, %v1075
      %1077 = vdwg.mxu0
      %1078 = vmatpush.msra.mxu0 0.0
      %1079 = vmatpush.msra.mxu0 0.0
      %1080 = vmatpush.msra.mxu0 0.0
      %1081 = vmatpush.msra.mxu0 0.0
      %1082 = vmatpush.msra.mxu0 0.0
      %1083 = vmatpush.msra.mxu0 0.0
      %1084 = vmatpush.msra.mxu0 0.0
      %1085 = vmatpush.msra.mxu0 0.0
      %1086 = vmatpush.msra.mxu0 0.0
      %1087 = vmatpush.msra.mxu0 0.0
      %1088 = vmatpush.msra.mxu0 0.0
      %1089 = vmatpush.msra.mxu0 0.0
      %1090 = vmatpush.msra.mxu0 0.0
      %1091 = vmatpush.msra.mxu0 0.0
      %1092 = vmatpush.msra.mxu0 0.0
      %1093 = vmatpush.msra.mxu0 %v1056
      %1094 = vmatmul.f32.gmra.mxu0 %v1050
      %v1095 = vpop.f32.mrf.mxu0
      %v1096 = vadd.f32 %v1047, %v1095
      %1097 = vdwg.mxu0
      %1098 = vst [vmem:[%s352] sm:$0xff] %v1076
      %1099 = vst [vmem:[%s352 + $0x8] sm:$0xff] %v1096
      %s1100 = smul.u32 8, 1
      %s1101 = smul.u32 %s1100, 2
      %s1102 = sshll.u32 %s1101, 4
      %1103 = dma.done [#allocation2], %s1102
      %p1104 = scmp.lt.s32.totalorder %s20, 1
      %s1105 = scalar_select %p1104, %s20, 1
      %s1106 = smul.addr %s1105, 4
      %s1107 = smul.addr %s1106, 8
      %s1108 = scalar_lea.vmem %s9, %s1107
      // Predicated region
      $region76: #{shc_forward.1} parent=55 // pred_check
        %p1109 = pneg %p237
      $region77: #{shc_forward.1} parent=55 // pred_check_branch
        %1111 = sbr.rel (%p1109) target = $region79
      $region78: #{shc_forward.1} parent=55 // pred_region
        _
      $region79: #{shc_forward.1} parent=55 // pred_fallthru
        _
    $region56: #{shc_forward.1} parent=5 // pred_fallthru
      _
    %p1112 = scmp.le.s32.totalorder 2, %s15
    // Predicated region
    $region80: #{shc_forward.1} parent=5 // pred_check
      %p1113 = pneg %p1112
    $region81: #{shc_forward.1} parent=5 // pred_check_branch
      %1115 = sbr.rel (%p1113) target = $region83
    $region82: #{shc_forward.1} parent=5 // pred_region
      %s1116 = ssub.s32 %s15, 2
      // Predicated region
      $region84: #{shc_forward.1} parent=82 // pred_check
        %p1117 = pneg %p243
      $region85: #{shc_forward.1} parent=82 // pred_check_branch
        %1119 = sbr.rel (%p1117) target = $region87
      $region86: #{shc_forward.1} parent=82 // pred_region
        %p1120 = scmp.lt.s32.totalorder %s21, 1
        %s1121 = scalar_select %p1120, %s21, 1
        %s1122 = smul.addr %s1121, 4
        %s1123 = smul.addr %s1122, 8
        %s1124 = scalar_lea.vmem %s9, %s1123
      $region87: #{shc_forward.1} parent=82 // pred_fallthru
        _
    $region83: #{shc_forward.1} parent=5 // pred_fallthru
      _
  $region6: #{shc_forward.1} parent=0 // loop_footer
    %s19 = sadd.s32 1, %s15
  $region7: #{shc_forward.1} parent=0 // loop_footer_branch
    %14 = sbr.rel target = $region3
  $region8: #{shc_forward.1} parent=0 // loop_exit
    _
  %1125 = vsyncmov [#allocation2]
  %s1126 = vpop.sfrf %1125
  %p1127 = scmp.eq.s32.totalorder %s1126, 0
  %p1128 = pneg %p1127
  %1130 = shalt.err (%p1128)

</llo_original>
